<compile_context>
chip_gen: v7x
topology: tpu7x:2x2x1
jax: 0.10.0
libtpu: 0.0.40
codegen_flags: <defaults>
</compile_context>

<pallas_src>
import math
from functools import partial

import jax
import jax.numpy as jnp
from jax.experimental import pallas as pl
from jax.experimental.pallas import tpu as pltpu

LN_EPS = 1e-5
_LANE = 128  # TPU lane width: output channels padded to a multiple of this


# ---------------------------------------------------------------------------
# small helpers
# ---------------------------------------------------------------------------
def _round_up(n, m):
    return ((n + m - 1) // m) * m


def _cdiv(a, b):
    return (a + b - 1) // b


def _row_mult(itemsize):
    # sublane packing multiple for the dtype (f32: 8, bf16: 16, int8/fp8: 32)
    return {4: 8, 2: 16, 1: 32}.get(itemsize, 8)


def _tpu_topology():
    """(vmem_limit_bytes, multi_core) — generation aware, safe defaults."""
    kind = ""
    try:
        kind = jax.devices()[0].device_kind.lower()
    except Exception:       # AOT / CPU lowering: introspection only, keep going
        kind = ""
    is_v7 = ("v7" in kind) or ("7x" in kind)
    vmem_phys = None
    try:
        info_fn = getattr(pltpu, "get_tpu_info", None)
        if info_fn is not None:
            vmem_phys = getattr(info_fn(), "vmem_capacity_bytes", None)
    except Exception:
        vmem_phys = None
    if not vmem_phys:
        # generation-aware fallback: only v7x has 64 MiB physical VMEM
        vmem_phys = (64 << 20) if is_v7 else (128 << 20)
    # ~3/4 of physical: 48 MiB on v7x, 96 MiB on v5e/v6e
    vmem_limit = max(32 << 20, min(int(vmem_phys) * 3 // 4, 96 << 20))
    # v7x (and v4) have 2 TensorCores per chip; v5e/v6e have one.
    multi_core = is_v7 or ("v4" in kind)
    return vmem_limit, multi_core


def _split_rows(M, tm_cap, row_mult, multi_core):
    """Pick (tm, grid_m, Mpad). On 2-TC chips aim for >= 4 evenly split tiles;
    on single-TC chips take the largest tile the budget allows."""
    Mr = _round_up(max(M, 1), row_mult)
    tm = max(row_mult, min(tm_cap, Mr))
    tm = (tm // row_mult) * row_mult
    if multi_core and Mr >= 4 * row_mult:
        tm = min(tm, _round_up(_cdiv(Mr, 4), row_mult))
    grid_m = _cdiv(Mr, tm)
    if multi_core and grid_m > 1 and grid_m % 2:
        grid_m += 1                      # even tile count -> balanced TC split
    return tm, grid_m, grid_m * tm


# ---------------------------------------------------------------------------
# kernels
# ---------------------------------------------------------------------------
def _layernorm_affine(y, gamma_row, beta_row, n_real, n_pad):
    """Numerically stable two-pass LayerNorm over the last dim of f32 `y`.

    Padded lanes of `y` are exactly zero (zero weight columns / zero bias), so
    the mean over the padded width divided by n_real is exact; the centered
    values are masked before the variance so padding cannot pollute it.
    """
    inv_n = 1.0 / float(n_real)
    mean = jnp.sum(y, axis=-1, keepdims=True) * inv_n
    centered = y - mean
    if n_pad != n_real:
        lane = jax.lax.broadcasted_iota(jnp.int32, y.shape, y.ndim - 1)
        centered = jnp.where(lane < n_real, centered, 0.0)
    var = jnp.sum(centered * centered, axis=-1, keepdims=True) * inv_n
    return centered * jax.lax.rsqrt(var + LN_EPS) * gamma_row + beta_row


def _proj_ln_kernel(x_ref, w_ref, p_ref, o_ref, *, n_real, n_pad):
    """Single-shot proj + bias + LayerNorm (weight VMEM-resident, grid = M tiles).

    x_ref: (tm, F) native dtype   w_ref: (F, Npad) native dtype (grid-invariant)
    p_ref: (3, Npad) f32 rows = [bias, gamma, beta]   o_ref: (tm, Npad)
    """
    y = jnp.dot(x_ref[...], w_ref[...], preferred_element_type=jnp.float32)
    y = y + p_ref[0:1, :]
    o_ref[...] = _layernorm_affine(
        y, p_ref[1:2, :], p_ref[2:3, :], n_real, n_pad).astype(o_ref.dtype)


def _proj_ln_ktiled_kernel(x_ref, w_ref, p_ref, o_ref, acc_ref, *, n_real, n_pad):
    """K-tiled reduction fallback for weights too large to keep VMEM-resident.

    Grid: (M tiles [parallel], K tiles over F [arbitrary, reduction]).
    """
    k = pl.program_id(1)

    @pl.when(k == 0)
    def _():
        # Fold the bias into the accumulator init (one less (tm, Npad) add in
        # the un-hidden finalize epilogue).
        acc_ref[...] = jnp.broadcast_to(p_ref[0:1, :], acc_ref.shape)

    acc_ref[...] += jnp.dot(x_ref[...], w_ref[...],
                            preferred_element_type=jnp.float32)

    @pl.when(k == pl.num_programs(1) - 1)
    def _():
        o_ref[...] = _layernorm_affine(
            acc_ref[...], p_ref[1:2, :], p_ref[2:3, :],
            n_real, n_pad).astype(o_ref.dtype)


# ---------------------------------------------------------------------------
# fused proj + LayerNorm pallas_call
# ---------------------------------------------------------------------------
def _fused_proj_layernorm(x2d, w, b, gamma, beta, *,
                          force_ktiled=False, max_k_tile=None):
    """x2d: (M, F), w: (F, N) -> LayerNorm(x2d @ w + b) * gamma + beta, (M, N)."""
    M, F = x2d.shape
    N = w.shape[1]
    itemsize = jnp.dtype(x2d.dtype).itemsize
    row_mult = _row_mult(itemsize)
    Npad = _round_up(N, _LANE)

    vmem_limit, multi_core = _tpu_topology()
    budget = max(vmem_limit - (8 << 20), 8 << 20)

    # f32 affine params: rows = [proj bias, LN gamma, LN beta]; padded lanes 0.
    params = jnp.zeros((3, Npad), jnp.float32)
    params = params.at[0, :N].set(b.astype(jnp.float32))
    params = params.at[1, :N].set(gamma.astype(jnp.float32))
    params = params.at[2, :N].set(beta.astype(jnp.float32))

    w_pad = w if Npad == N else jnp.pad(w, ((0, 0), (0, Npad - N)))

    # Conservative budget: grid-invariant inputs still get the default double
    # buffer allocation (they are only DMA'd once thanks to the invariant
    # index_map).  TODO(synk): pl.Buffered(1) would reclaim that VMEM.
    w_bytes = 2 * F * Npad * itemsize
    p_bytes = 2 * 3 * Npad * 4
    per_row_single = 2 * F * itemsize + 2 * Npad * itemsize + Npad * 4

    single_shot = (not force_ktiled) and (
        w_bytes + p_bytes + row_mult * per_row_single <= budget)

    if single_shot:
        # ----- resident-weight path: grid over M tiles only ------------------
        tm_cap = (budget - w_bytes - p_bytes) // per_row_single
        tm, grid_m, Mpad = _split_rows(M, min(512, tm_cap), row_mult, multi_core)
        x_p = x2d if Mpad == M else jnp.pad(x2d, ((0, Mpad - M), (0, 0)))

        cost = pl.CostEstimate(
            flops=int(2 * Mpad * F * Npad),
            transcendentals=int(Mpad),
            bytes_accessed=int(itemsize * (Mpad * F + F * Npad)
                               + 3 * Npad * 4 + itemsize * Mpad * Npad))

        out_p = pl.pallas_call(
            partial(_proj_ln_kernel, n_real=N, n_pad=Npad),
            out_shape=jax.ShapeDtypeStruct((Mpad, Npad), x2d.dtype),
            grid_spec=pltpu.PrefetchScalarGridSpec(
                num_scalar_prefetch=0,
                grid=(grid_m,),
                in_specs=[
                    pl.BlockSpec((tm, F), lambda i: (i, 0)),
                    pl.BlockSpec((F, Npad), lambda i: (0, 0)),   # resident weight
                    pl.BlockSpec((3, Npad), lambda i: (0, 0)),   # resident params
                ],
                out_specs=pl.BlockSpec((tm, Npad), lambda i: (i, 0)),
            ),
            compiler_params=pltpu.CompilerParams(
                dimension_semantics=("parallel",),
                vmem_limit_bytes=vmem_limit),
            cost_estimate=cost,
        )(x_p, w_pad, params)
        return out_p[:M, :N]

    # ----- K-tiled fallback (weight does not fit VMEM) ------------------------
    # Shrink tm first so the resident (tm, Npad) accumulator + output block stay
    # under ~half the budget (keeps tk large on v7x's smaller VMEM).
    per_row_fixed = Npad * 4 + 2 * Npad * itemsize
    tm_cap = max(row_mult, (budget // 2 - p_bytes) // per_row_fixed)
    tm, grid_m, Mpad = _split_rows(M, min(512, tm_cap), row_mult, multi_core)

    fixed = tm * per_row_fixed + p_bytes
    per_tk = 2 * (tm + Npad) * itemsize            # double-buffered x & w slabs
    tk_cap = max(_LANE, (budget - fixed) // per_tk)
    tk = min(tk_cap, _round_up(F, _LANE))
    if max_k_tile is not None:
        tk = min(tk, max_k_tile)
    tk = max(_LANE, (tk // _LANE) * _LANE)
    Fpad = _round_up(F, tk)                        # zero-padded reduction: exact
    grid_k = Fpad // tk

    x_p = x2d
    if (Mpad, Fpad) != (M, F):
        x_p = jnp.pad(x2d, ((0, Mpad - M), (0, Fpad - F)))
    w_p = w_pad if Fpad == F else jnp.pad(w_pad, ((0, Fpad - F), (0, 0)))

    cost = pl.CostEstimate(
        flops=int(2 * Mpad * Fpad * Npad),
        transcendentals=int(Mpad),
        # in this path the weight is genuinely re-read once per M tile
        bytes_accessed=int(itemsize * (Mpad * Fpad + grid_m * Fpad * Npad)
                           + 3 * Npad * 4 + itemsize * Mpad * Npad))

    out_p = pl.pallas_call(
        partial(_proj_ln_ktiled_kernel, n_real=N, n_pad=Npad),
        out_shape=jax.ShapeDtypeStruct((Mpad, Npad), x2d.dtype),
        grid_spec=pltpu.PrefetchScalarGridSpec(
            num_scalar_prefetch=0,
            grid=(grid_m, grid_k),
            in_specs=[
                pl.BlockSpec((tm, tk), lambda i, k: (i, k)),
                pl.BlockSpec((tk, Npad), lambda i, k: (k, 0)),
                pl.BlockSpec((3, Npad), lambda i, k: (0, 0)),    # resident params
            ],
            out_specs=pl.BlockSpec((tm, Npad), lambda i, k: (i, 0)),
            scratch_shapes=[pltpu.VMEM((tm, Npad), jnp.float32)],
        ),
        compiler_params=pltpu.CompilerParams(
            dimension_semantics=("parallel", "arbitrary"),
            vmem_limit_bytes=vmem_limit),
        cost_estimate=cost,
    )(x_p, w_p, params)
    return out_p[:M, :N]


# ---------------------------------------------------------------------------
# module forward
# ---------------------------------------------------------------------------
def downsample_nd_forward(x, w, b, gamma, beta, kernel_size, *,
                          channels_last=False, force_ktiled=False,
                          max_k_tile=None):
    """JAX/Pallas equivalent of DownsampleNd.forward (eval mode; dropout = id).

    x: (B, C, D0, ..., D_{ndim-1})  channels-first
    w: (F, N) with F = prod(kernel_size) * C  (PyTorch proj.weight transposed)
    b, gamma, beta: (N,)
    Returns (B, N, d0, ...) (module semantics) or, with channels_last=True,
    the kernel's lane-dense (B, d0, ..., N) layout (skips one HBM round trip
    when the consumer can take channels-last).
    """
    ndim = len(kernel_size)
    B, C = x.shape[0], x.shape[1]
    spatial = x.shape[2:]
    assert len(spatial) == ndim
    for s, k in zip(spatial, kernel_size):
        assert s % k == 0, "spatial dim not divisible by kernel_size"
    d = [s // k for s, k in zip(spatial, kernel_size)]

    # Space-to-depth: b c (d0 k0) (d1 k1)... -> (b d0 d1 ...) x (k0 k1 ... c)
    # TODO(synk): fuse this rearrange into the kernel (manual DMA of natural
    # slabs + in-kernel (k0,k1) deinterleave) to drop this HBM round trip; a
    # plain BlockSpec cannot express the strided gather, so it stays in XLA.
    shape = [B, C]
    for di, ki in zip(d, kernel_size):
        shape += [di, ki]
    xr = x.reshape(shape)
    perm = ([0] + [2 + 2 * i for i in range(ndim)]
            + [3 + 2 * i for i in range(ndim)] + [1])
    xr = jnp.transpose(xr, perm)

    M = B * math.prod(d)
    F = math.prod(kernel_size) * C
    x2d = xr.reshape(M, F)

    out2d = _fused_proj_layernorm(x2d, w, b, gamma, beta,
                                  force_ktiled=force_ktiled,
                                  max_k_tile=max_k_tile)

    N = w.shape[1]
    out = out2d.reshape([B] + d + [N])
    if channels_last:
        return out                      # lane-dense layout straight from the kernel
    # Module semantics: b d0 ... c_out -> b c_out d0 ...
    return jnp.transpose(out, [0, ndim + 1] + list(range(1, ndim + 1)))


def init_params(key, in_channels, kernel_size, out_channels=None,
                dtype=jnp.float32):
    """Deterministic parameter init mirroring DownsampleNd._init_weights."""
    kernel_product = math.prod(kernel_size)
    total_in = in_channels * kernel_product
    if out_channels is None:
        out_channels = total_in // 2
    w_t = 0.02 * jax.random.truncated_normal(
        key, -2.0, 2.0, (out_channels, total_in), dtype=jnp.float32)
    w = jnp.asarray(w_t.T, dtype)                    # (F, N)
    b = jnp.zeros((out_channels,), jnp.float32)
    gamma = jnp.ones((out_channels,), jnp.float32)
    beta = jnp.zeros((out_channels,), jnp.float32)
    return w, b, gamma, beta, out_channels


def _reference(x, w, b, gamma, beta, kernel_size):
    """Pure-JAX reference of the same forward pass (eval mode)."""
    ndim = len(kernel_size)
    B, C = x.shape[0], x.shape[1]
    d = [s // k for s, k in zip(x.shape[2:], kernel_size)]
    shape = [B, C]
    for di, ki in zip(d, kernel_size):
        shape += [di, ki]
    xr = x.reshape(shape)
    perm = ([0] + [2 + 2 * i for i in range(ndim)]
            + [3 + 2 * i for i in range(ndim)] + [1])
    xr = jnp.transpose(xr, perm).reshape([B] + d + [-1])
    y = xr @ w + b
    mean = jnp.mean(y, axis=-1, keepdims=True)
    var = jnp.mean(jnp.square(y - mean), axis=-1, keepdims=True)
    y = (y - mean) * jax.lax.rsqrt(var + LN_EPS) * gamma + beta
    return jnp.transpose(y, [0, ndim + 1] + list(range(1, ndim + 1)))


if __name__ == "__main__":
    key = jax.random.PRNGKey(0)
    k_x, k_w, k_x2, k_w2 = jax.random.split(key, 4)

    # --- Case 1: f32, single-shot resident-weight path; N=8 exercises lane
    #             padding + masked LayerNorm statistics.
    B, C, H, W = 2, 4, 16, 16
    ks = (2, 2)
    x = jax.random.normal(k_x, (B, C, H, W), dtype=jnp.float32)
    w, b, gamma, beta, N = init_params(k_w, C, ks)

    out = jax.block_until_ready(downsample_nd_forward(x, w, b, gamma, beta, ks))
    assert out.shape == (B, N, H // 2, W // 2), out.shape
    ref = jax.block_until_ready(_reference(x, w, b, gamma, beta, ks))
    assert jnp.allclose(out, ref, atol=2e-4, rtol=2e-4), float(
        jnp.max(jnp.abs(out - ref)))

    # channels-last output (layout change folded into the consumer)
    out_cl = jax.block_until_ready(
        downsample_nd_forward(x, w, b, gamma, beta, ks, channels_last=True))
    assert jnp.allclose(out_cl, jnp.moveaxis(ref, 1, -1), atol=2e-4, rtol=2e-4)

    # --- Case 2: bf16 activations/weights (native-dtype MXU, f32 LN math)
    out_bf = jax.block_until_ready(
        downsample_nd_forward(x.astype(jnp.bfloat16), w.astype(jnp.bfloat16),
                              b, gamma, beta, ks))
    assert out_bf.dtype == jnp.bfloat16
    assert jnp.allclose(out_bf.astype(jnp.float32), ref, atol=3e-2, rtol=3e-2)

    # --- Case 3: force the K-tiled reduction path (used when the weight does
    #             not fit VMEM); max_k_tile=128 gives 4 reduction steps here.
    C2 = 128
    x2 = jax.random.normal(k_x2, (2, C2, 16, 16), dtype=jnp.float32)
    w2, b2, g2, be2, N2 = init_params(k_w2, C2, ks)
    out2 = jax.block_until_ready(
        downsample_nd_forward(x2, w2, b2, g2, be2, ks,
                              force_ktiled=True, max_k_tile=128))
    assert out2.shape == (2, N2, 8, 8), out2.shape
    ref2 = jax.block_until_ready(_reference(x2, w2, b2, g2, be2, ks))
    assert jnp.allclose(out2, ref2, atol=2e-3, rtol=2e-3), float(
        jnp.max(jnp.abs(out2 - ref2)))

    print("KERNEL_OK")
</pallas_src>

<mosaic_0001>
module attributes {stable_mosaic.version = 11 : i64} {
  func.func @_proj_ln_kernel(%arg0: i32, %arg1: memref<128x16xf32, #tpu.memory_space<vmem>>, %arg2: memref<16x128xf32, #tpu.memory_space<vmem>>, %arg3: memref<3x128xf32, #tpu.memory_space<vmem>>, %arg4: memref<128x128xf32, #tpu.memory_space<vmem>>) attributes {dimension_semantics = [#tpu.dimension_semantics<parallel>], iteration_bounds = array<i64: 1>, scalar_prefetch = 0 : i64, scratch_operands = 0 : i64, tpu.core_type = #tpu.core_type<tc>, window_params = [{transform_indices = @transform_0, window_bounds = array<i64: 128, 16>}, {pipeline_mode = #tpu.pipeline_mode<synchronous>, transform_indices = @transform_1, window_bounds = array<i64: 16, 128>}, {pipeline_mode = #tpu.pipeline_mode<synchronous>, transform_indices = @transform_2, window_bounds = array<i64: 3, 128>}, {transform_indices = @transform_3, window_bounds = array<i64: 128, 128>}]} {
    %c0 = arith.constant 0 : index
    %c0_0 = arith.constant 0 : index
    %0 = vector.load %arg1[%c0, %c0_0] : memref<128x16xf32, #tpu.memory_space<vmem>>, vector<128x16xf32>
    %c0_1 = arith.constant 0 : index
    %c0_2 = arith.constant 0 : index
    %1 = vector.load %arg2[%c0_1, %c0_2] : memref<16x128xf32, #tpu.memory_space<vmem>>, vector<16x128xf32>
    %cst = arith.constant dense<0.000000e+00> : vector<128x128xf32>
    %2 = tpu.matmul %0, %1, %cst {dimension_numbers = #tpu.dot_dimension_numbers<[1], [0], [0], [1], [0, 0, 1, 1], [], []>} : vector<128x16xf32>, vector<16x128xf32>, vector<128x128xf32> -> vector<128x128xf32>
    %c0_3 = arith.constant 0 : index
    %c0_4 = arith.constant 0 : index
    %3 = vector.load %arg3[%c0_3, %c0_4] : memref<3x128xf32, #tpu.memory_space<vmem>>, vector<1x128xf32>
    %4 = vector.broadcast %3 : vector<1x128xf32> to vector<128x128xf32>
    %5 = arith.addf %2, %4 : vector<128x128xf32>
    %c1 = arith.constant 1 : index
    %c0_5 = arith.constant 0 : index
    %6 = vector.load %arg3[%c1, %c0_5] : memref<3x128xf32, #tpu.memory_space<vmem>>, vector<1x128xf32>
    %c2 = arith.constant 2 : index
    %c0_6 = arith.constant 0 : index
    %7 = vector.load %arg3[%c2, %c0_6] : memref<3x128xf32, #tpu.memory_space<vmem>>, vector<1x128xf32>
    %cst_7 = arith.constant dense<0.000000e+00> : vector<128xf32>
    %8 = vector.multi_reduction <add>, %5, %cst_7 [1] : vector<128x128xf32> to vector<128xf32>
    %9 = vector.shape_cast %8 : vector<128xf32> to vector<128x1xf32>
    %cst_8 = arith.constant 1.250000e-01 : f32
    %10 = vector.broadcast %cst_8 : f32 to vector<128x1xf32>
    %11 = arith.mulf %9, %10 : vector<128x1xf32>
    %12 = vector.broadcast %11 : vector<128x1xf32> to vector<128x128xf32>
    %13 = arith.subf %5, %12 : vector<128x128xf32>
    %14 = tpu.iota {dimensions = array<i32: 1>} : vector<128x128xi32>
    %c8_i32 = arith.constant 8 : i32
    %15 = vector.broadcast %c8_i32 : i32 to vector<128x128xi32>
    %16 = arith.cmpi slt, %14, %15 : vector<128x128xi32>
    %cst_9 = arith.constant 0.000000e+00 : f32
    %17 = vector.broadcast %cst_9 : f32 to vector<128x128xf32>
    %18 = arith.select %16, %13, %17 : vector<128x128xi1>, vector<128x128xf32>
    %19 = arith.mulf %18, %18 : vector<128x128xf32>
    %cst_10 = arith.constant dense<0.000000e+00> : vector<128xf32>
    %20 = vector.multi_reduction <add>, %19, %cst_10 [1] : vector<128x128xf32> to vector<128xf32>
    %21 = vector.shape_cast %20 : vector<128xf32> to vector<128x1xf32>
    %cst_11 = arith.constant 1.250000e-01 : f32
    %22 = vector.broadcast %cst_11 : f32 to vector<128x1xf32>
    %23 = arith.mulf %21, %22 : vector<128x1xf32>
    %cst_12 = arith.constant 9.99999974E-6 : f32
    %24 = vector.broadcast %cst_12 : f32 to vector<128x1xf32>
    %25 = arith.addf %23, %24 : vector<128x1xf32>
    %26 = math.rsqrt %25 : vector<128x1xf32>
    %27 = vector.broadcast %26 : vector<128x1xf32> to vector<128x128xf32>
    %28 = arith.mulf %18, %27 : vector<128x128xf32>
    %29 = vector.broadcast %6 : vector<1x128xf32> to vector<128x128xf32>
    %30 = arith.mulf %28, %29 : vector<128x128xf32>
    %31 = vector.broadcast %7 : vector<1x128xf32> to vector<128x128xf32>
    %32 = arith.addf %30, %31 : vector<128x128xf32>
    %c0_13 = arith.constant 0 : index
    %c0_14 = arith.constant 0 : index
    %33 = vector.load %arg4[%c0_13, %c0_14] : memref<128x128xf32, #tpu.memory_space<vmem>>, vector<128x128xf32>
    tpu.vector_store %arg4[%c0_13, %c0_14], %32 {strides = array<i32>} : memref<128x128xf32, #tpu.memory_space<vmem>>, vector<128x128xf32>,
    return
  }
  func.func @transform_0(%arg0: i32) -> (i32, i32) {
    %c0_i32 = arith.constant 0 : i32
    %c0_i32_0 = arith.constant 0 : i32
    return %arg0, %c0_i32 : i32, i32
  }
  func.func @transform_1(%arg0: i32) -> (i32, i32) {
    %c0_i32 = arith.constant 0 : i32
    %c0_i32_0 = arith.constant 0 : i32
    %c0_i32_1 = arith.constant 0 : i32
    return %c0_i32, %c0_i32_0 : i32, i32
  }
  func.func @transform_2(%arg0: i32) -> (i32, i32) {
    %c0_i32 = arith.constant 0 : i32
    %c0_i32_0 = arith.constant 0 : i32
    %c0_i32_1 = arith.constant 0 : i32
    return %c0_i32, %c0_i32_0 : i32, i32
  }
  func.func @transform_3(%arg0: i32) -> (i32, i32) {
    %c0_i32 = arith.constant 0 : i32
    %c0_i32_0 = arith.constant 0 : i32
    return %arg0, %c0_i32 : i32, i32
  }
}

</mosaic_0001>

<llo_original>
// kernel: tpu_custom_call.1
$region0: #{tpu_custom_call.1}
  #allocation0 [shape = 'u32[]', space=smem, size = 0x4, offset = 0x4, fixed_abs, tag = 'smem constant byte address 0x4 - core index']
  #allocation1 [shape = 'u32[144,128]{1,0:T(1,128)}', space=vmem, size = 0x12000, scoped, tag = 'internal scratch']
  %s0 = inlined_call_operand.hbm [shape: f32[128,16], index: 0, kind: input, shape index: {}]
  %s1 = inlined_call_operand.hbm [shape: f32[16,128], index: 1, kind: input, shape index: {}]
  %s2 = inlined_call_operand.hbm [shape: f32[3,128], index: 2, kind: input, shape index: {}]
  %s3 = inlined_call_operand.hbm [shape: f32[128,128], index: 3, kind: output, shape index: {}]
  %s4 = sld [smem:[#allocation0]]
  $region34: #{tpu_custom_call.1} parent=0
    _
  %s6 = ssub.s32 1, %s4
  %s7 = scalar_select 0, %s6, %s4
  $region1: #{tpu_custom_call.1} parent=0
    #allocation2 [shape = 'u8[65536]{0}', space=vmem, size = 0x10000, scoped, tag = 'input window, operand 0, single buffered']
    #allocation3 [shape = 's32[1]{0}', space=sflag, size = 0x4, scoped, tag = 'scoped memory for tpu_custom_call.1']
    #allocation4 [shape = 's32[1]{0}', space=sflag, size = 0x4, scoped, tag = 'scoped memory for tpu_custom_call.1']
    #allocation5 [shape = 'u8[8192]{0}', space=vmem, size = 0x2000, scoped, tag = 'input window, operand 1, single buffered']
    #allocation6 [shape = 's32[1]{0}', space=sflag, size = 0x4, scoped, tag = 'scoped memory for tpu_custom_call.1']
    #allocation7 [shape = 'u8[2048]{0}', space=vmem, size = 0x800, scoped, tag = 'input window, operand 2, single buffered']
    #allocation8 [shape = 'u8[65536]{0}', space=vmem, size = 0x10000, scoped, tag = 'output window, operand 0, single buffered']
    %8 = vsyncpa [#allocation3], 0
    %9 = vsyncpa [#allocation6], 0
    %10 = vsyncpa [#allocation4], 0
    // Predicated region
    $region2: #{tpu_custom_call.1} parent=1 // pred_check
      _
    $region3: #{tpu_custom_call.1} parent=1 // pred_check_branch
      %12 = sbr.rel (0) target = $region5
    $region4: #{tpu_custom_call.1} parent=1 // pred_region
      %s14 = ssub.s32 2048, 2048
      %15 = vsyncadd [#allocation3], %s14
      %s16 = sshll.u32 [#allocation2], 4
      %s17 = int_to_ptr.vmem [resolvable:$true] %s16
      %22 = dma.hbm_to_vmem [thread:$0]  %s0, 2048, %s17, [#allocation3], 128, 128, 8
    $region5: #{tpu_custom_call.1} parent=1 // pred_fallthru
      _
    // Predicated region
    $region6: #{tpu_custom_call.1} parent=1 // pred_check
      _
    $region7: #{tpu_custom_call.1} parent=1 // pred_check_branch
      %24 = sbr.rel (0) target = $region9
    $region8: #{tpu_custom_call.1} parent=1 // pred_region
      %s26 = ssub.s32 256, 256
      %27 = vsyncadd [#allocation6], %s26
      %s28 = sshll.u32 [#allocation5], 4
      %s29 = int_to_ptr.vmem [resolvable:$true] %s28
      %34 = dma.hbm_to_vmem [thread:$0]  %s1, 256, %s29, [#allocation6], 128, 128, 8
    $region9: #{tpu_custom_call.1} parent=1 // pred_fallthru
      _
    // Predicated region
    $region10: #{tpu_custom_call.1} parent=1 // pred_check
      _
    $region11: #{tpu_custom_call.1} parent=1 // pred_check_branch
      %36 = sbr.rel (0) target = $region13
    $region12: #{tpu_custom_call.1} parent=1 // pred_region
      %s38 = ssub.s32 64, 64
      %39 = vsyncadd [#allocation6], %s38
      %s41 = sshll.u32 [#allocation7], 4
      %s42 = int_to_ptr.vmem [resolvable:$true] %s41
      %44 = dma.hbm_to_vmem [thread:$0]  %s2, 64, %s42, [#allocation6]
    $region13: #{tpu_custom_call.1} parent=1 // pred_fallthru
      _
    // Predicated region
    $region14: #{tpu_custom_call.1} parent=1 // pred_check
      _
    $region15: #{tpu_custom_call.1} parent=1 // pred_check_branch
      %46 = sbr.rel (0) target = $region17
    $region16: #{tpu_custom_call.1} parent=1 // pred_region
      %47 = dma.done [#allocation3], 2048
    $region17: #{tpu_custom_call.1} parent=1 // pred_fallthru
      _
    // Predicated region
    $region18: #{tpu_custom_call.1} parent=1 // pred_check
      _
    $region19: #{tpu_custom_call.1} parent=1 // pred_check_branch
      %49 = sbr.rel (0) target = $region21
    $region20: #{tpu_custom_call.1} parent=1 // pred_region
      %50 = dma.done [#allocation6], 256
    $region21: #{tpu_custom_call.1} parent=1 // pred_fallthru
      _
    // Predicated region
    $region22: #{tpu_custom_call.1} parent=1 // pred_check
      _
    $region23: #{tpu_custom_call.1} parent=1 // pred_check_branch
      %52 = sbr.rel (0) target = $region25
    $region24: #{tpu_custom_call.1} parent=1 // pred_region
      %53 = dma.done [#allocation6], 64
    $region25: #{tpu_custom_call.1} parent=1 // pred_fallthru
      _
    %v54 = vld [vmem:[#allocation2] sm:$0xff]
    %v55 = vld [vmem:[#allocation2 + $0x8] sm:$0xff]
    %v56 = vld [vmem:[#allocation2 + $0x10] sm:$0xff]
    %v57 = vld [vmem:[#allocation2 + $0x18] sm:$0xff]
    %v58 = vld [vmem:[#allocation2 + $0x20] sm:$0xff]
    %v59 = vld [vmem:[#allocation2 + $0x28] sm:$0xff]
    %v60 = vld [vmem:[#allocation2 + $0x30] sm:$0xff]
    %v61 = vld [vmem:[#allocation2 + $0x38] sm:$0xff]
    %v62 = vld [vmem:[#allocation2 + $0x40] sm:$0xff]
    %v63 = vld [vmem:[#allocation2 + $0x48] sm:$0xff]
    %v64 = vld [vmem:[#allocation2 + $0x50] sm:$0xff]
    %v65 = vld [vmem:[#allocation2 + $0x58] sm:$0xff]
    %v66 = vld [vmem:[#allocation2 + $0x60] sm:$0xff]
    %v67 = vld [vmem:[#allocation2 + $0x68] sm:$0xff]
    %v68 = vld [vmem:[#allocation2 + $0x70] sm:$0xff]
    %v69 = vld [vmem:[#allocation2 + $0x78] sm:$0xff]
    %v70 = vld [vmem:[#allocation5] sm:$0xff]
    %v71 = vld [vmem:[#allocation5 + $0x8] sm:$0xff]
    %v72 = vld [vmem:[#allocation7] sm:$0x1]
    %v73 = vlaneseq
    %v74 = vshrl.u32 %v73, 7
    %v75 = vsub.s32 0, %v74
    %v76 = vrot.slane %v72, %v75
    %vm77 = vcmask 130048
    %v79 = vsel %vm77, %v54, 0
    %v82 = vsel %vm77, %v55, 0
    %v85 = vsel %vm77, %v56, 0
    %v88 = vsel %vm77, %v57, 0
    %v91 = vsel %vm77, %v58, 0
    %v94 = vsel %vm77, %v59, 0
    %v97 = vsel %vm77, %v60, 0
    %v100 = vsel %vm77, %v61, 0
    %v103 = vsel %vm77, %v62, 0
    %v106 = vsel %vm77, %v63, 0
    %v109 = vsel %vm77, %v64, 0
    %v112 = vsel %vm77, %v65, 0
    %v115 = vsel %vm77, %v66, 0
    %v118 = vsel %vm77, %v67, 0
    %v121 = vsel %vm77, %v68, 0
    %v124 = vsel %vm77, %v69, 0
    %126 = vmatprep.subr.mxu0 0.0
    %127 = vmatpush1.msra.mxu0 %v70
    %128 = vmatprep.subr.mxu0 0.0
    %129 = vmatpush1.msra.mxu0 %v71
    %130 = vmatprep.subr.mxu0 0.0
    %131 = vmatpush1.msra.mxu0 0.0
    %132 = vmatprep.subr.mxu0 0.0
    %133 = vmatpush1.msra.mxu0 0.0
    %134 = vmatprep.subr.mxu0 0.0
    %135 = vmatpush1.msra.mxu0 0.0
    %136 = vmatprep.subr.mxu0 0.0
    %137 = vmatpush1.msra.mxu0 0.0
    %138 = vmatprep.subr.mxu0 0.0
    %139 = vmatpush1.msra.mxu0 0.0
    %140 = vmatprep.subr.mxu0 0.0
    %141 = vmatpush1.msra.mxu0 0.0
    %142 = vmatprep.subr.mxu0 0.0
    %143 = vmatpush1.msra.mxu0 0.0
    %144 = vmatprep.subr.mxu0 0.0
    %145 = vmatpush1.msra.mxu0 0.0
    %146 = vmatprep.subr.mxu0 0.0
    %147 = vmatpush1.msra.mxu0 0.0
    %148 = vmatprep.subr.mxu0 0.0
    %149 = vmatpush1.msra.mxu0 0.0
    %150 = vmatprep.subr.mxu0 0.0
    %151 = vmatpush1.msra.mxu0 0.0
    %152 = vmatprep.subr.mxu0 0.0
    %153 = vmatpush1.msra.mxu0 0.0
    %154 = vmatprep.subr.mxu0 0.0
    %155 = vmatpush1.msra.mxu0 0.0
    %156 = vmatprep.subr.mxu0 0.0
    %157 = vmatpush1.msra.mxu0 0.0
    %158 = vmatprep.subr.mxu0 0.0
    %159 = vmatpush1.msra.mxu0 0.0
    %160 = vmatprep.subr.mxu0 0.0
    %161 = vmatpush1.msra.mxu0 0.0
    %162 = vmatprep.subr.mxu0 0.0
    %163 = vmatpush1.msra.mxu0 0.0
    %164 = vmatprep.subr.mxu0 0.0
    %165 = vmatpush1.msra.mxu0 0.0
    %166 = vmatprep.subr.mxu0 0.0
    %167 = vmatpush1.msra.mxu0 0.0
    %168 = vmatprep.subr.mxu0 0.0
    %169 = vmatpush1.msra.mxu0 0.0
    %170 = vmatprep.subr.mxu0 0.0
    %171 = vmatpush1.msra.mxu0 0.0
    %172 = vmatprep.subr.mxu0 0.0
    %173 = vmatpush1.msra.mxu0 0.0
    %174 = vmatprep.subr.mxu0 0.0
    %175 = vmatpush1.msra.mxu0 0.0
    %176 = vmatprep.subr.mxu0 0.0
    %177 = vmatpush1.msra.mxu0 0.0
    %178 = vmatprep.subr.mxu0 0.0
    %179 = vmatpush1.msra.mxu0 0.0
    %180 = vmatprep.subr.mxu0 0.0
    %181 = vmatpush1.msra.mxu0 0.0
    %182 = vmatprep.subr.mxu0 0.0
    %183 = vmatpush1.msra.mxu0 0.0
    %184 = vmatprep.subr.mxu0 0.0
    %185 = vmatpush1.msra.mxu0 0.0
    %186 = vmatprep.subr.mxu0 0.0
    %187 = vmatpush1.msra.mxu0 0.0
    %188 = vmatprep.subr.mxu0 0.0
    %189 = vmatpush1.msra.mxu0 0.0
    %190 = vmatprep.mubr.f32.mxu0 0.0
    %191 = vmatmul.mubr.f32.gmra.mrb[0].mxu0 %v79
    %v192 = vpop.f32.mrb[0].mxu0
    %v193 = vadd.f32 %v76, %v192
    %v194 = vpop.f32.mrb[0].mxu0
    %195 = vmatprep.mubr.f32.mxu0 0.0
    %196 = vmatmul.mubr.f32.gmra.mrb[0].mxu0 %v82
    %v197 = vpop.f32.mrb[0].mxu0
    %v198 = vadd.f32 %v76, %v197
    %v199 = vpop.f32.mrb[0].mxu0
    %200 = vmatprep.mubr.f32.mxu0 0.0
    %201 = vmatmul.mubr.f32.gmra.mrb[0].mxu0 %v85
    %v202 = vpop.f32.mrb[0].mxu0
    %v203 = vadd.f32 %v76, %v202
    %v204 = vpop.f32.mrb[0].mxu0
    %205 = vmatprep.mubr.f32.mxu0 0.0
    %206 = vmatmul.mubr.f32.gmra.mrb[0].mxu0 %v88
    %v207 = vpop.f32.mrb[0].mxu0
    %v208 = vadd.f32 %v76, %v207
    %v209 = vpop.f32.mrb[0].mxu0
    %210 = vmatprep.mubr.f32.mxu0 0.0
    %211 = vmatmul.mubr.f32.gmra.mrb[0].mxu0 %v91
    %v212 = vpop.f32.mrb[0].mxu0
    %v213 = vadd.f32 %v76, %v212
    %v214 = vpop.f32.mrb[0].mxu0
    %215 = vmatprep.mubr.f32.mxu0 0.0
    %216 = vmatmul.mubr.f32.gmra.mrb[0].mxu0 %v94
    %v217 = vpop.f32.mrb[0].mxu0
    %v218 = vadd.f32 %v76, %v217
    %v219 = vpop.f32.mrb[0].mxu0
    %220 = vmatprep.mubr.f32.mxu0 0.0
    %221 = vmatmul.mubr.f32.gmra.mrb[0].mxu0 %v97
    %v222 = vpop.f32.mrb[0].mxu0
    %v223 = vadd.f32 %v76, %v222
    %v224 = vpop.f32.mrb[0].mxu0
    %225 = vmatprep.mubr.f32.mxu0 0.0
    %226 = vmatmul.mubr.f32.gmra.mrb[0].mxu0 %v100
    %v227 = vpop.f32.mrb[0].mxu0
    %v228 = vadd.f32 %v76, %v227
    %v229 = vpop.f32.mrb[0].mxu0
    %230 = vmatprep.mubr.f32.mxu0 0.0
    %231 = vmatmul.mubr.f32.gmra.mrb[0].mxu0 %v103
    %v232 = vpop.f32.mrb[0].mxu0
    %v233 = vadd.f32 %v76, %v232
    %v234 = vpop.f32.mrb[0].mxu0
    %235 = vmatprep.mubr.f32.mxu0 0.0
    %236 = vmatmul.mubr.f32.gmra.mrb[0].mxu0 %v106
    %v237 = vpop.f32.mrb[0].mxu0
    %v238 = vadd.f32 %v76, %v237
    %v239 = vpop.f32.mrb[0].mxu0
    %240 = vmatprep.mubr.f32.mxu0 0.0
    %241 = vmatmul.mubr.f32.gmra.mrb[0].mxu0 %v109
    %v242 = vpop.f32.mrb[0].mxu0
    %v243 = vadd.f32 %v76, %v242
    %v244 = vpop.f32.mrb[0].mxu0
    %245 = vmatprep.mubr.f32.mxu0 0.0
    %246 = vmatmul.mubr.f32.gmra.mrb[0].mxu0 %v112
    %v247 = vpop.f32.mrb[0].mxu0
    %v248 = vadd.f32 %v76, %v247
    %v249 = vpop.f32.mrb[0].mxu0
    %250 = vmatprep.mubr.f32.mxu0 0.0
    %251 = vmatmul.mubr.f32.gmra.mrb[0].mxu0 %v115
    %v252 = vpop.f32.mrb[0].mxu0
    %v253 = vadd.f32 %v76, %v252
    %v254 = vpop.f32.mrb[0].mxu0
    %255 = vmatprep.mubr.f32.mxu0 0.0
    %256 = vmatmul.mubr.f32.gmra.mrb[0].mxu0 %v118
    %v257 = vpop.f32.mrb[0].mxu0
    %v258 = vadd.f32 %v76, %v257
    %v259 = vpop.f32.mrb[0].mxu0
    %260 = vmatprep.mubr.f32.mxu0 0.0
    %261 = vmatmul.mubr.f32.gmra.mrb[0].mxu0 %v121
    %v262 = vpop.f32.mrb[0].mxu0
    %v263 = vadd.f32 %v76, %v262
    %v264 = vpop.f32.mrb[0].mxu0
    %265 = vmatprep.mubr.f32.mxu0 0.0
    %266 = vmatmul.mubr.f32.gmra.mrb[0].mxu0 %v124
    %v267 = vpop.f32.mrb[0].mxu0
    %v268 = vadd.f32 %v76, %v267
    %v269 = vpop.f32.mrb[0].mxu0
    %270 = vdwg.mxu0
    %v271 = vld [vmem:[#allocation7 + $0x1] sm:$0x1]
    %v272 = vld [vmem:[#allocation7 + $0x2] sm:$0x1]
    %273 = vadd.xlane.f32.xlu0 %v193
    %v274 = vpop.xlane.xlu0 %273
    %275 = vadd.xlane.f32.xlu0 %v198
    %v276 = vpop.xlane.xlu0 %275
    %277 = vadd.xlane.f32.xlu0 %v203
    %v278 = vpop.xlane.xlu0 %277
    %279 = vadd.xlane.f32.xlu0 %v208
    %v280 = vpop.xlane.xlu0 %279
    %281 = vadd.xlane.f32.xlu0 %v213
    %v282 = vpop.xlane.xlu0 %281
    %283 = vadd.xlane.f32.xlu0 %v218
    %v284 = vpop.xlane.xlu0 %283
    %285 = vadd.xlane.f32.xlu0 %v223
    %v286 = vpop.xlane.xlu0 %285
    %287 = vadd.xlane.f32.xlu0 %v228
    %v288 = vpop.xlane.xlu0 %287
    %289 = vadd.xlane.f32.xlu0 %v233
    %v290 = vpop.xlane.xlu0 %289
    %291 = vadd.xlane.f32.xlu0 %v238
    %v292 = vpop.xlane.xlu0 %291
    %293 = vadd.xlane.f32.xlu0 %v243
    %v294 = vpop.xlane.xlu0 %293
    %295 = vadd.xlane.f32.xlu0 %v248
    %v296 = vpop.xlane.xlu0 %295
    %297 = vadd.xlane.f32.xlu0 %v253
    %v298 = vpop.xlane.xlu0 %297
    %299 = vadd.xlane.f32.xlu0 %v258
    %v300 = vpop.xlane.xlu0 %299
    %301 = vadd.xlane.f32.xlu0 %v263
    %v302 = vpop.xlane.xlu0 %301
    %303 = vadd.xlane.f32.xlu0 %v268
    %v304 = vpop.xlane.xlu0 %303
    %v305 = vmul.f32 %v274, 0.125
    %v306 = vmul.f32 %v276, 0.125
    %v307 = vmul.f32 %v278, 0.125
    %v308 = vmul.f32 %v280, 0.125
    %v309 = vmul.f32 %v282, 0.125
    %v310 = vmul.f32 %v284, 0.125
    %v311 = vmul.f32 %v286, 0.125
    %v312 = vmul.f32 %v288, 0.125
    %v313 = vmul.f32 %v290, 0.125
    %v314 = vmul.f32 %v292, 0.125
    %v315 = vmul.f32 %v294, 0.125
    %v316 = vmul.f32 %v296, 0.125
    %v317 = vmul.f32 %v298, 0.125
    %v318 = vmul.f32 %v300, 0.125
    %v319 = vmul.f32 %v302, 0.125
    %v320 = vmul.f32 %v304, 0.125
    %v321 = vsub.f32 %v193, %v305
    %v322 = vsub.f32 %v198, %v306
    %v323 = vsub.f32 %v203, %v307
    %v324 = vsub.f32 %v208, %v308
    %v325 = vsub.f32 %v213, %v309
    %v326 = vsub.f32 %v218, %v310
    %v327 = vsub.f32 %v223, %v311
    %v328 = vsub.f32 %v228, %v312
    %v329 = vsub.f32 %v233, %v313
    %v330 = vsub.f32 %v238, %v314
    %v331 = vsub.f32 %v243, %v315
    %v332 = vsub.f32 %v248, %v316
    %v333 = vsub.f32 %v253, %v317
    %v334 = vsub.f32 %v258, %v318
    %v335 = vsub.f32 %v263, %v319
    %v336 = vsub.f32 %v268, %v320
    %v337 = vlaneseq
    %v338 = vand.u32 %v337, 127
    %vm339 = vcmp.lt.s32.totalorder %v338, 8
    %v340 = vsel %vm339, %v321, 0.0
    %v341 = vsel %vm339, %v322, 0.0
    %v342 = vsel %vm339, %v323, 0.0
    %v343 = vsel %vm339, %v324, 0.0
    %v344 = vsel %vm339, %v325, 0.0
    %v345 = vsel %vm339, %v326, 0.0
    %v346 = vsel %vm339, %v327, 0.0
    %v347 = vsel %vm339, %v328, 0.0
    %v348 = vsel %vm339, %v329, 0.0
    %v349 = vsel %vm339, %v330, 0.0
    %v350 = vsel %vm339, %v331, 0.0
    %v351 = vsel %vm339, %v332, 0.0
    %v352 = vsel %vm339, %v333, 0.0
    %v353 = vsel %vm339, %v334, 0.0
    %v354 = vsel %vm339, %v335, 0.0
    %v355 = vsel %vm339, %v336, 0.0
    %v356 = vmul.f32 %v340, %v340
    %v357 = vmul.f32 %v341, %v341
    %v358 = vmul.f32 %v342, %v342
    %v359 = vmul.f32 %v343, %v343
    %v360 = vmul.f32 %v344, %v344
    %v361 = vmul.f32 %v345, %v345
    %v362 = vmul.f32 %v346, %v346
    %v363 = vmul.f32 %v347, %v347
    %v364 = vmul.f32 %v348, %v348
    %v365 = vmul.f32 %v349, %v349
    %v366 = vmul.f32 %v350, %v350
    %v367 = vmul.f32 %v351, %v351
    %v368 = vmul.f32 %v352, %v352
    %v369 = vmul.f32 %v353, %v353
    %v370 = vmul.f32 %v354, %v354
    %v371 = vmul.f32 %v355, %v355
    %372 = vadd.xlane.f32.xlu0 %v356
    %v373 = vpop.xlane.xlu0 %372
    %374 = vadd.xlane.f32.xlu0 %v357
    %v375 = vpop.xlane.xlu0 %374
    %376 = vadd.xlane.f32.xlu0 %v358
    %v377 = vpop.xlane.xlu0 %376
    %378 = vadd.xlane.f32.xlu0 %v359
    %v379 = vpop.xlane.xlu0 %378
    %380 = vadd.xlane.f32.xlu0 %v360
    %v381 = vpop.xlane.xlu0 %380
    %382 = vadd.xlane.f32.xlu0 %v361
    %v383 = vpop.xlane.xlu0 %382
    %384 = vadd.xlane.f32.xlu0 %v362
    %v385 = vpop.xlane.xlu0 %384
    %386 = vadd.xlane.f32.xlu0 %v363
    %v387 = vpop.xlane.xlu0 %386
    %388 = vadd.xlane.f32.xlu0 %v364
    %v389 = vpop.xlane.xlu0 %388
    %390 = vadd.xlane.f32.xlu0 %v365
    %v391 = vpop.xlane.xlu0 %390
    %392 = vadd.xlane.f32.xlu0 %v366
    %v393 = vpop.xlane.xlu0 %392
    %394 = vadd.xlane.f32.xlu0 %v367
    %v395 = vpop.xlane.xlu0 %394
    %396 = vadd.xlane.f32.xlu0 %v368
    %v397 = vpop.xlane.xlu0 %396
    %398 = vadd.xlane.f32.xlu0 %v369
    %v399 = vpop.xlane.xlu0 %398
    %400 = vadd.xlane.f32.xlu0 %v370
    %v401 = vpop.xlane.xlu0 %400
    %402 = vadd.xlane.f32.xlu0 %v371
    %v403 = vpop.xlane.xlu0 %402
    %v404 = vmul.f32 %v373, 0.125
    %v405 = vmul.f32 %v375, 0.125
    %v406 = vmul.f32 %v377, 0.125
    %v407 = vmul.f32 %v379, 0.125
    %v408 = vmul.f32 %v381, 0.125
    %v409 = vmul.f32 %v383, 0.125
    %v410 = vmul.f32 %v385, 0.125
    %v411 = vmul.f32 %v387, 0.125
    %v412 = vmul.f32 %v389, 0.125
    %v413 = vmul.f32 %v391, 0.125
    %v414 = vmul.f32 %v393, 0.125
    %v415 = vmul.f32 %v395, 0.125
    %v416 = vmul.f32 %v397, 0.125
    %v417 = vmul.f32 %v399, 0.125
    %v418 = vmul.f32 %v401, 0.125
    %v419 = vmul.f32 %v403, 0.125
    %v420 = vadd.f32 %v404, 1e-05
    %v421 = vadd.f32 %v405, 1e-05
    %v422 = vadd.f32 %v406, 1e-05
    %v423 = vadd.f32 %v407, 1e-05
    %v424 = vadd.f32 %v408, 1e-05
    %v425 = vadd.f32 %v409, 1e-05
    %v426 = vadd.f32 %v410, 1e-05
    %v427 = vadd.f32 %v411, 1e-05
    %v428 = vadd.f32 %v412, 1e-05
    %v429 = vadd.f32 %v413, 1e-05
    %v430 = vadd.f32 %v414, 1e-05
    %v431 = vadd.f32 %v415, 1e-05
    %v432 = vadd.f32 %v416, 1e-05
    %v433 = vadd.f32 %v417, 1e-05
    %v434 = vadd.f32 %v418, 1e-05
    %v435 = vadd.f32 %v419, 1e-05
    %v436 = vrsqrt.pop %v420
    %v437 = vrsqrt.pop %v421
    %v438 = vrsqrt.pop %v422
    %v439 = vrsqrt.pop %v423
    %v440 = vrsqrt.pop %v424
    %v441 = vrsqrt.pop %v425
    %v442 = vrsqrt.pop %v426
    %v443 = vrsqrt.pop %v427
    %v444 = vrsqrt.pop %v428
    %v445 = vrsqrt.pop %v429
    %v446 = vrsqrt.pop %v430
    %v447 = vrsqrt.pop %v431
    %v448 = vrsqrt.pop %v432
    %v449 = vrsqrt.pop %v433
    %v450 = vrsqrt.pop %v434
    %v451 = vrsqrt.pop %v435
    %v452 = vmul.f32 %v340, %v436
    %v453 = vmul.f32 %v341, %v437
    %v454 = vmul.f32 %v342, %v438
    %v455 = vmul.f32 %v343, %v439
    %v456 = vmul.f32 %v344, %v440
    %v457 = vmul.f32 %v345, %v441
    %v458 = vmul.f32 %v346, %v442
    %v459 = vmul.f32 %v347, %v443
    %v460 = vmul.f32 %v348, %v444
    %v461 = vmul.f32 %v349, %v445
    %v462 = vmul.f32 %v350, %v446
    %v463 = vmul.f32 %v351, %v447
    %v464 = vmul.f32 %v352, %v448
    %v465 = vmul.f32 %v353, %v449
    %v466 = vmul.f32 %v354, %v450
    %v467 = vmul.f32 %v355, %v451
    %v468 = vlaneseq
    %v469 = vshrl.u32 %v468, 7
    %v470 = vsub.s32 0, %v469
    %v471 = vrot.slane %v271, %v470
    %v472 = vmul.f32 %v452, %v471
    %v473 = vmul.f32 %v453, %v471
    %v474 = vmul.f32 %v454, %v471
    %v475 = vmul.f32 %v455, %v471
    %v476 = vmul.f32 %v456, %v471
    %v477 = vmul.f32 %v457, %v471
    %v478 = vmul.f32 %v458, %v471
    %v479 = vmul.f32 %v459, %v471
    %v480 = vmul.f32 %v460, %v471
    %v481 = vmul.f32 %v461, %v471
    %v482 = vmul.f32 %v462, %v471
    %v483 = vmul.f32 %v463, %v471
    %v484 = vmul.f32 %v464, %v471
    %v485 = vmul.f32 %v465, %v471
    %v486 = vmul.f32 %v466, %v471
    %v487 = vmul.f32 %v467, %v471
    %v488 = vlaneseq
    %v489 = vshrl.u32 %v488, 7
    %v490 = vsub.s32 0, %v489
    %v491 = vrot.slane %v272, %v490
    %v492 = vadd.f32 %v472, %v491
    %v493 = vadd.f32 %v473, %v491
    %v494 = vadd.f32 %v474, %v491
    %v495 = vadd.f32 %v475, %v491
    %v496 = vadd.f32 %v476, %v491
    %v497 = vadd.f32 %v477, %v491
    %v498 = vadd.f32 %v478, %v491
    %v499 = vadd.f32 %v479, %v491
    %v500 = vadd.f32 %v480, %v491
    %v501 = vadd.f32 %v481, %v491
    %v502 = vadd.f32 %v482, %v491
    %v503 = vadd.f32 %v483, %v491
    %v504 = vadd.f32 %v484, %v491
    %v505 = vadd.f32 %v485, %v491
    %v506 = vadd.f32 %v486, %v491
    %v507 = vadd.f32 %v487, %v491
    %508 = vst [vmem:[#allocation8] sm:$0xff] %v492
    %509 = vst [vmem:[#allocation8 + $0x8] sm:$0xff] %v493
    %510 = vst [vmem:[#allocation8 + $0x10] sm:$0xff] %v494
    %511 = vst [vmem:[#allocation8 + $0x18] sm:$0xff] %v495
    %512 = vst [vmem:[#allocation8 + $0x20] sm:$0xff] %v496
    %513 = vst [vmem:[#allocation8 + $0x28] sm:$0xff] %v497
    %514 = vst [vmem:[#allocation8 + $0x30] sm:$0xff] %v498
    %515 = vst [vmem:[#allocation8 + $0x38] sm:$0xff] %v499
    %516 = vst [vmem:[#allocation8 + $0x40] sm:$0xff] %v500
    %517 = vst [vmem:[#allocation8 + $0x48] sm:$0xff] %v501
    %518 = vst [vmem:[#allocation8 + $0x50] sm:$0xff] %v502
    %519 = vst [vmem:[#allocation8 + $0x58] sm:$0xff] %v503
    %520 = vst [vmem:[#allocation8 + $0x60] sm:$0xff] %v504
    %521 = vst [vmem:[#allocation8 + $0x68] sm:$0xff] %v505
    %522 = vst [vmem:[#allocation8 + $0x70] sm:$0xff] %v506
    %523 = vst [vmem:[#allocation8 + $0x78] sm:$0xff] %v507
    // Predicated region
    $region26: #{tpu_custom_call.1} parent=1 // pred_check
      _
    $region27: #{tpu_custom_call.1} parent=1 // pred_check_branch
      %525 = sbr.rel (0) target = $region29
    $region28: #{tpu_custom_call.1} parent=1 // pred_region
      %s527 = ssub.s32 2048, 2048
      %528 = vsyncadd [#allocation4], %s527
      %s529 = sshll.u32 [#allocation8], 4
      %s530 = int_to_ptr.vmem [resolvable:$true] %s529
      %535 = dma.vmem_to_hbm [thread:$0]  %s530, 2048, %s3, [#allocation4], 128, 128, 8
    $region29: #{tpu_custom_call.1} parent=1 // pred_fallthru
      _
    // Predicated region
    $region30: #{tpu_custom_call.1} parent=1 // pred_check
      _
    $region31: #{tpu_custom_call.1} parent=1 // pred_check_branch
      %537 = sbr.rel (0) target = $region33
    $region32: #{tpu_custom_call.1} parent=1 // pred_region
      %538 = dma.done [#allocation4], 2048
    $region33: #{tpu_custom_call.1} parent=1 // pred_fallthru
      _
    %539 = vsyncpa [#allocation3], 1
    %540 = vsyncpa [#allocation6], 1
    %541 = vsyncpa [#allocation4], 1

</llo_original>
